<compile_context>
chip_gen: v5e
topology: v5e:2x2
jax: 0.10.0
libtpu: 0.0.40
codegen_flags: <defaults>
</compile_context>

<pallas_src>
import functools

import jax
import jax.numpy as jnp
from jax.experimental import pallas as pl
from jax.experimental.pallas import tpu as pltpu


def _round_up(x: int, m: int) -> int:
    return (x + m - 1) // m * m


def mlp_kernel(x_ref, w1_ref, b1_ref, w2_ref, b2_ref, o_ref):
    # Layer 1: h = relu(x @ W1 + b1)   (MXU matmul, f32 accumulate; VPU epilogue)
    h = jnp.dot(x_ref[...], w1_ref[...], preferred_element_type=jnp.float32)
    h = jnp.maximum(h + b1_ref[...], 0.0)          # (TM, H) + (1, H) broadcast, f32
    # Feed the second matmul in the same (possibly bf16) dtype as the weights
    # to keep the MXU on its fast path and halve the h footprint.
    h = h.astype(w2_ref.dtype)
    # Layer 2: y = h @ W2 + b2
    y = jnp.dot(h, w2_ref[...], preferred_element_type=jnp.float32)
    o_ref[...] = (y + b2_ref[...]).astype(o_ref.dtype)


def two_layer_net(x, w1, b1, w2, b2, *, block_m=512, compute_dtype=None,
                  vmem_limit_bytes=None):
    """Fused y = relu(x @ W1 + b1) @ W2 + b2.

    x: (N, D_in); w1: (D_in, H); b1: (1, H); w2: (H, D_out); b2: (1, D_out).
    compute_dtype: dtype fed to the MXU (e.g. jnp.bfloat16); accumulation is f32.
    """
    N, D_in = x.shape
    H = w1.shape[1]
    D_out = w2.shape[1]
    if compute_dtype is None:
        compute_dtype = x.dtype
    f32 = jnp.float32

    # --- lane-dense / sublane-aligned padding -------------------------------
    d_in_p = _round_up(D_in, 128)
    h_p = _round_up(H, 128)
    d_out_p = _round_up(D_out, 128)
    tm = min(block_m, _round_up(N, 8))     # tile rows; multiple of 8 sublanes
    n_p = _round_up(N, tm)

    xp = jnp.zeros((n_p, d_in_p), compute_dtype).at[:N, :D_in].set(
        x.astype(compute_dtype))
    w1p = jnp.zeros((d_in_p, h_p), compute_dtype).at[:D_in, :H].set(
        w1.astype(compute_dtype))
    b1p = jnp.zeros((1, h_p), f32).at[:, :H].set(b1.astype(f32))
    w2p = jnp.zeros((h_p, d_out_p), compute_dtype).at[:H, :D_out].set(
        w2.astype(compute_dtype))
    b2p = jnp.zeros((1, d_out_p), f32).at[:, :D_out].set(b2.astype(f32))

    itemsize = jnp.dtype(compute_dtype).itemsize
    out_itemsize = jnp.dtype(x.dtype).itemsize
    cost = pl.CostEstimate(
        flops=2 * n_p * d_in_p * h_p + 2 * n_p * h_p * d_out_p,
        transcendentals=0,
        bytes_accessed=(xp.size * itemsize + w1p.size * itemsize
                        + w2p.size * itemsize + b1p.size * 4 + b2p.size * 4
                        + n_p * d_out_p * out_itemsize),
    )

    grid = (n_p // tm,)
    out_p = pl.pallas_call(
        mlp_kernel,
        out_shape=jax.ShapeDtypeStruct((n_p, d_out_p), x.dtype),
        grid=grid,
        in_specs=[
            # x tiles stream over the batch; weights/biases stay resident.
            pl.BlockSpec((tm, d_in_p), lambda i: (i, 0)),
            pl.BlockSpec((d_in_p, h_p), lambda i: (0, 0)),
            pl.BlockSpec((1, h_p), lambda i: (0, 0)),
            pl.BlockSpec((h_p, d_out_p), lambda i: (0, 0)),
            pl.BlockSpec((1, d_out_p), lambda i: (0, 0)),
        ],
        out_specs=pl.BlockSpec((tm, d_out_p), lambda i: (i, 0)),
        compiler_params=pltpu.CompilerParams(
            dimension_semantics=("parallel",),
            vmem_limit_bytes=vmem_limit_bytes,
        ),
        cost_estimate=cost,
    )(xp, w1p, b1p, w2p, b2p)

    return out_p[:N, :D_out]


def init_params(key, D_in, H, D_out, dtype=jnp.float32):
    """Deterministic init mimicking torch.nn.Linear (uniform +/- 1/sqrt(fan_in))."""
    k1, k2, k3, k4 = jax.random.split(key, 4)
    bound1 = 1.0 / jnp.sqrt(D_in)
    bound2 = 1.0 / jnp.sqrt(H)
    # Stored already transposed relative to PyTorch's (out, in) layout.
    w1 = jax.random.uniform(k1, (D_in, H), dtype, -bound1, bound1)
    b1 = jax.random.uniform(k2, (1, H), dtype, -bound1, bound1)
    w2 = jax.random.uniform(k3, (H, D_out), dtype, -bound2, bound2)
    b2 = jax.random.uniform(k4, (1, D_out), dtype, -bound2, bound2)
    return w1, b1, w2, b2


if __name__ == "__main__":
    # NOTE: at these toy shapes the kernel is pure overhead vs plain XLA; they
    # only exercise correctness of the tiled / padded design.
    N, D_in, H, D_out = 8, 32, 64, 16
    key = jax.random.PRNGKey(0)
    kx, kp = jax.random.split(key)
    x = jax.random.normal(kx, (N, D_in), jnp.float32)
    w1, b1, w2, b2 = init_params(kp, D_in, H, D_out)

    # Reference in plain JAX (same math as the torch forward).
    y_ref = jnp.maximum(x @ w1 + b1, 0.0) @ w2 + b2

    # f32 matmul path (exact-tolerance check).
    run_f32 = jax.jit(functools.partial(two_layer_net, compute_dtype=jnp.float32))
    y_f32 = run_f32(x, w1, b1, w2, b2)
    jax.block_until_ready(y_f32)
    assert y_f32.shape == (N, D_out)
    assert jnp.allclose(y_f32, y_ref, atol=1e-5, rtol=1e-5)

    # bf16 MXU path with f32 accumulation (loosened tolerance).
    run_bf16 = jax.jit(functools.partial(two_layer_net, compute_dtype=jnp.bfloat16))
    y_bf16 = run_bf16(x, w1, b1, w2, b2)
    jax.block_until_ready(y_bf16)
    assert y_bf16.shape == (N, D_out)
    assert jnp.allclose(y_bf16, y_ref, atol=5e-2, rtol=5e-2)

    print("KERNEL_OK")
</pallas_src>

<mosaic_0001>
module attributes {stable_mosaic.version = 11 : i64} {
  func.func @mlp_kernel(%arg0: i32, %arg1: memref<8x128xf32, #tpu.memory_space<vmem>>, %arg2: memref<128x128xf32, #tpu.memory_space<vmem>>, %arg3: memref<1x128xf32, #tpu.memory_space<vmem>>, %arg4: memref<128x128xf32, #tpu.memory_space<vmem>>, %arg5: memref<1x128xf32, #tpu.memory_space<vmem>>, %arg6: memref<8x128xf32, #tpu.memory_space<vmem>>) attributes {dimension_semantics = [#tpu.dimension_semantics<parallel>], iteration_bounds = array<i64: 1>, scalar_prefetch = 0 : i64, scratch_operands = 0 : i64, tpu.core_type = #tpu.core_type<tc>, window_params = [{transform_indices = @transform_0, window_bounds = array<i64: 8, 128>}, {pipeline_mode = #tpu.pipeline_mode<synchronous>, transform_indices = @transform_1, window_bounds = array<i64: 128, 128>}, {pipeline_mode = #tpu.pipeline_mode<synchronous>, transform_indices = @transform_2, window_bounds = array<i64: 1, 128>}, {pipeline_mode = #tpu.pipeline_mode<synchronous>, transform_indices = @transform_3, window_bounds = array<i64: 128, 128>}, {pipeline_mode = #tpu.pipeline_mode<synchronous>, transform_indices = @transform_4, window_bounds = array<i64: 1, 128>}, {transform_indices = @transform_5, window_bounds = array<i64: 8, 128>}]} {
    %c0 = arith.constant 0 : index
    %c0_0 = arith.constant 0 : index
    %0 = vector.load %arg1[%c0, %c0_0] : memref<8x128xf32, #tpu.memory_space<vmem>>, vector<8x128xf32>
    %c0_1 = arith.constant 0 : index
    %c0_2 = arith.constant 0 : index
    %1 = vector.load %arg2[%c0_1, %c0_2] : memref<128x128xf32, #tpu.memory_space<vmem>>, vector<128x128xf32>
    %cst = arith.constant dense<0.000000e+00> : vector<8x128xf32>
    %2 = tpu.matmul %0, %1, %cst {dimension_numbers = #tpu.dot_dimension_numbers<[1], [0], [0], [1], [0, 0, 1, 1], [], []>} : vector<8x128xf32>, vector<128x128xf32>, vector<8x128xf32> -> vector<8x128xf32>
    %c0_3 = arith.constant 0 : index
    %c0_4 = arith.constant 0 : index
    %3 = vector.load %arg3[%c0_3, %c0_4] : memref<1x128xf32, #tpu.memory_space<vmem>>, vector<1x128xf32>
    %4 = vector.broadcast %3 : vector<1x128xf32> to vector<8x128xf32>
    %5 = arith.addf %2, %4 : vector<8x128xf32>
    %cst_5 = arith.constant 0.000000e+00 : f32
    %6 = vector.broadcast %cst_5 : f32 to vector<8x128xf32>
    %7 = arith.maximumf %5, %6 : vector<8x128xf32>
    %c0_6 = arith.constant 0 : index
    %c0_7 = arith.constant 0 : index
    %8 = vector.load %arg4[%c0_6, %c0_7] : memref<128x128xf32, #tpu.memory_space<vmem>>, vector<128x128xf32>
    %cst_8 = arith.constant dense<0.000000e+00> : vector<8x128xf32>
    %9 = tpu.matmul %7, %8, %cst_8 {dimension_numbers = #tpu.dot_dimension_numbers<[1], [0], [0], [1], [0, 0, 1, 1], [], []>} : vector<8x128xf32>, vector<128x128xf32>, vector<8x128xf32> -> vector<8x128xf32>
    %c0_9 = arith.constant 0 : index
    %c0_10 = arith.constant 0 : index
    %10 = vector.load %arg5[%c0_9, %c0_10] : memref<1x128xf32, #tpu.memory_space<vmem>>, vector<1x128xf32>
    %11 = vector.broadcast %10 : vector<1x128xf32> to vector<8x128xf32>
    %12 = arith.addf %9, %11 : vector<8x128xf32>
    %c0_11 = arith.constant 0 : index
    %c0_12 = arith.constant 0 : index
    %13 = vector.load %arg6[%c0_11, %c0_12] : memref<8x128xf32, #tpu.memory_space<vmem>>, vector<8x128xf32>
    tpu.vector_store %arg6[%c0_11, %c0_12], %12 {strides = array<i32>} : memref<8x128xf32, #tpu.memory_space<vmem>>, vector<8x128xf32>,
    return
  }
  func.func @transform_0(%arg0: i32) -> (i32, i32) {
    %c0_i32 = arith.constant 0 : i32
    %c0_i32_0 = arith.constant 0 : i32
    return %arg0, %c0_i32 : i32, i32
  }
  func.func @transform_1(%arg0: i32) -> (i32, i32) {
    %c0_i32 = arith.constant 0 : i32
    %c0_i32_0 = arith.constant 0 : i32
    %c0_i32_1 = arith.constant 0 : i32
    return %c0_i32, %c0_i32_0 : i32, i32
  }
  func.func @transform_2(%arg0: i32) -> (i32, i32) {
    %c0_i32 = arith.constant 0 : i32
    %c0_i32_0 = arith.constant 0 : i32
    %c0_i32_1 = arith.constant 0 : i32
    return %c0_i32, %c0_i32_0 : i32, i32
  }
  func.func @transform_3(%arg0: i32) -> (i32, i32) {
    %c0_i32 = arith.constant 0 : i32
    %c0_i32_0 = arith.constant 0 : i32
    %c0_i32_1 = arith.constant 0 : i32
    return %c0_i32, %c0_i32_0 : i32, i32
  }
  func.func @transform_4(%arg0: i32) -> (i32, i32) {
    %c0_i32 = arith.constant 0 : i32
    %c0_i32_0 = arith.constant 0 : i32
    %c0_i32_1 = arith.constant 0 : i32
    return %c0_i32, %c0_i32_0 : i32, i32
  }
  func.func @transform_5(%arg0: i32) -> (i32, i32) {
    %c0_i32 = arith.constant 0 : i32
    %c0_i32_0 = arith.constant 0 : i32
    return %arg0, %c0_i32 : i32, i32
  }
}

</mosaic_0001>

<llo_original>
// kernel: two_layer_net.1
$region0: #{two_layer_net.1}
  #allocation0 [shape = 'u32[]', space=smem, size = 0x4, offset = 0x4, fixed_abs, tag = 'smem constant byte address 0x4 - core index']
  #allocation1 [shape = 'u32[72,128]{1,0:T(1,128)}', space=vmem, size = 0x9000, scoped, tag = 'internal scratch']
  %s0 = inlined_call_operand.vmem [shape: f32[8,128], index: 0, kind: input, shape index: {}]
  %s1 = inlined_call_operand.vmem [shape: f32[128,128], index: 1, kind: input, shape index: {}]
  %s2 = inlined_call_operand.vmem [shape: f32[1,128], index: 2, kind: input, shape index: {}]
  %s3 = inlined_call_operand.vmem [shape: f32[128,128], index: 3, kind: input, shape index: {}]
  %s4 = inlined_call_operand.vmem [shape: f32[1,128], index: 4, kind: input, shape index: {}]
  %s5 = inlined_call_operand.hbm [shape: f32[8,128], index: 5, kind: output, shape index: {}]
  %s6 = sld [smem:[#allocation0]]
  $region30: #{two_layer_net.1} parent=0
    _
  %s8 = ssub.s32 1, %s6
  %s9 = scalar_select 0, %s8, %s6
  $region1: #{two_layer_net.1} parent=0
    #allocation2 [shape = 'u8[4096]{0}', space=vmem, size = 0x1000, scoped, tag = 'output window, operand 0, single buffered']
    #allocation3 [shape = 's32[1]{0}', space=sflag, size = 0x4, scoped, tag = 'scoped memory for two_layer_net.1']
    %10 = vsyncpa [#allocation3], 0
    // Predicated region
    $region2: #{two_layer_net.1} parent=1 // pred_check
      _
    $region3: #{two_layer_net.1} parent=1 // pred_check_branch
      %12 = sbr.rel (0) target = $region5
    $region4: #{two_layer_net.1} parent=1 // pred_region
      _
    $region5: #{two_layer_net.1} parent=1 // pred_fallthru
      _
    // Predicated region
    $region6: #{two_layer_net.1} parent=1 // pred_check
      _
    $region7: #{two_layer_net.1} parent=1 // pred_check_branch
      %14 = sbr.rel (0) target = $region9
    $region8: #{two_layer_net.1} parent=1 // pred_region
      _
    $region9: #{two_layer_net.1} parent=1 // pred_fallthru
      _
    // Predicated region
    $region10: #{two_layer_net.1} parent=1 // pred_check
      _
    $region11: #{two_layer_net.1} parent=1 // pred_check_branch
      %16 = sbr.rel (0) target = $region13
    $region12: #{two_layer_net.1} parent=1 // pred_region
      _
    $region13: #{two_layer_net.1} parent=1 // pred_fallthru
      _
    // Predicated region
    $region14: #{two_layer_net.1} parent=1 // pred_check
      _
    $region15: #{two_layer_net.1} parent=1 // pred_check_branch
      %18 = sbr.rel (0) target = $region17
    $region16: #{two_layer_net.1} parent=1 // pred_region
      _
    $region17: #{two_layer_net.1} parent=1 // pred_fallthru
      _
    // Predicated region
    $region18: #{two_layer_net.1} parent=1 // pred_check
      _
    $region19: #{two_layer_net.1} parent=1 // pred_check_branch
      %20 = sbr.rel (0) target = $region21
    $region20: #{two_layer_net.1} parent=1 // pred_region
      _
    $region21: #{two_layer_net.1} parent=1 // pred_fallthru
      _
    %v21 = vld [vmem:[%s0] sm:$0xff]
    %v22 = vld [vmem:[%s1] sm:$0xff]
    %v23 = vld [vmem:[%s1 + $0x8] sm:$0xff]
    %v24 = vld [vmem:[%s1 + $0x10] sm:$0xff]
    %v25 = vld [vmem:[%s1 + $0x18] sm:$0xff]
    %v26 = vld [vmem:[%s1 + $0x20] sm:$0xff]
    %v27 = vld [vmem:[%s1 + $0x28] sm:$0xff]
    %v28 = vld [vmem:[%s1 + $0x30] sm:$0xff]
    %v29 = vld [vmem:[%s1 + $0x38] sm:$0xff]
    %v30 = vld [vmem:[%s1 + $0x40] sm:$0xff]
    %v31 = vld [vmem:[%s1 + $0x48] sm:$0xff]
    %v32 = vld [vmem:[%s1 + $0x50] sm:$0xff]
    %v33 = vld [vmem:[%s1 + $0x58] sm:$0xff]
    %v34 = vld [vmem:[%s1 + $0x60] sm:$0xff]
    %v35 = vld [vmem:[%s1 + $0x68] sm:$0xff]
    %v36 = vld [vmem:[%s1 + $0x70] sm:$0xff]
    %v37 = vld [vmem:[%s1 + $0x78] sm:$0xff]
    %v38 = vld [vmem:[%s2] sm:$0x1]
    %v40 = vperm.slane %v38, 0
    %42 = vmatpush.msra.mxu0 %v37
    %43 = vmatpush.msra.mxu0 %v36
    %44 = vmatpush.msra.mxu0 %v35
    %45 = vmatpush.msra.mxu0 %v34
    %46 = vmatpush.msra.mxu0 %v33
    %47 = vmatpush.msra.mxu0 %v32
    %48 = vmatpush.msra.mxu0 %v31
    %49 = vmatpush.msra.mxu0 %v30
    %50 = vmatpush.msra.mxu0 %v29
    %51 = vmatpush.msra.mxu0 %v28
    %52 = vmatpush.msra.mxu0 %v27
    %53 = vmatpush.msra.mxu0 %v26
    %54 = vmatpush.msra.mxu0 %v25
    %55 = vmatpush.msra.mxu0 %v24
    %56 = vmatpush.msra.mxu0 %v23
    %57 = vmatpush.msra.mxu0 %v22
    %58 = vmatmul.f32.gmra.mxu0 %v21
    %v59 = vpop.f32.mrf.mxu0
    %v60 = vadd.f32 %v40, %v59
    %61 = vdwg.mxu0
    %v62 = vmax.f32 %v60, 0.0
    %v63 = vld [vmem:[%s3] sm:$0xff]
    %v64 = vld [vmem:[%s3 + $0x8] sm:$0xff]
    %v65 = vld [vmem:[%s3 + $0x10] sm:$0xff]
    %v66 = vld [vmem:[%s3 + $0x18] sm:$0xff]
    %v67 = vld [vmem:[%s3 + $0x20] sm:$0xff]
    %v68 = vld [vmem:[%s3 + $0x28] sm:$0xff]
    %v69 = vld [vmem:[%s3 + $0x30] sm:$0xff]
    %v70 = vld [vmem:[%s3 + $0x38] sm:$0xff]
    %v71 = vld [vmem:[%s3 + $0x40] sm:$0xff]
    %v72 = vld [vmem:[%s3 + $0x48] sm:$0xff]
    %v73 = vld [vmem:[%s3 + $0x50] sm:$0xff]
    %v74 = vld [vmem:[%s3 + $0x58] sm:$0xff]
    %v75 = vld [vmem:[%s3 + $0x60] sm:$0xff]
    %v76 = vld [vmem:[%s3 + $0x68] sm:$0xff]
    %v77 = vld [vmem:[%s3 + $0x70] sm:$0xff]
    %v78 = vld [vmem:[%s3 + $0x78] sm:$0xff]
    %v79 = vld [vmem:[%s4] sm:$0x1]
    %v81 = vperm.slane %v79, 0
    %83 = vmatpush.msra.mxu0 %v78
    %84 = vmatpush.msra.mxu0 %v77
    %85 = vmatpush.msra.mxu0 %v76
    %86 = vmatpush.msra.mxu0 %v75
    %87 = vmatpush.msra.mxu0 %v74
    %88 = vmatpush.msra.mxu0 %v73
    %89 = vmatpush.msra.mxu0 %v72
    %90 = vmatpush.msra.mxu0 %v71
    %91 = vmatpush.msra.mxu0 %v70
    %92 = vmatpush.msra.mxu0 %v69
    %93 = vmatpush.msra.mxu0 %v68
    %94 = vmatpush.msra.mxu0 %v67
    %95 = vmatpush.msra.mxu0 %v66
    %96 = vmatpush.msra.mxu0 %v65
    %97 = vmatpush.msra.mxu0 %v64
    %98 = vmatpush.msra.mxu0 %v63
    %99 = vmatmul.f32.gmra.mxu0 %v62
    %v100 = vpop.f32.mrf.mxu0
    %v101 = vadd.f32 %v81, %v100
    %102 = vdwg.mxu0
    %103 = vst [vmem:[#allocation2] sm:$0xff] %v101
    // Predicated region
    $region22: #{two_layer_net.1} parent=1 // pred_check
      _
    $region23: #{two_layer_net.1} parent=1 // pred_check_branch
      %105 = sbr.rel (0) target = $region25
    $region24: #{two_layer_net.1} parent=1 // pred_region
      %107 = vsyncadd [#allocation3], 0
      %s109 = sshll.u32 [#allocation2], 4
      %s110 = int_to_ptr.vmem [resolvable:$true] %s109
      %s111 = sshll.u32 %s5, 4
      %s112 = int_to_ptr.hbm [resolvable:$true] %s111
      %114 = dma.vmem_to_hbm [thread:$0]  %s110, 128, %s112, [#allocation3]
    $region25: #{two_layer_net.1} parent=1 // pred_fallthru
      _
    // Predicated region
    $region26: #{two_layer_net.1} parent=1 // pred_check
      _
    $region27: #{two_layer_net.1} parent=1 // pred_check_branch
      %116 = sbr.rel (0) target = $region29
    $region28: #{two_layer_net.1} parent=1 // pred_region
      %118 = dma.done [#allocation3], 128
    $region29: #{two_layer_net.1} parent=1 // pred_fallthru
      _
    %119 = vsyncpa [#allocation3], 1

</llo_original>
